<compile_context>
chip_gen: v6e
topology: v6e:2x2x1
jax: 0.10.0
libtpu: 0.0.40
codegen_flags: <defaults>
</compile_context>

<pallas_src>
import jax
import jax.numpy as jnp
from jax import lax
from jax.experimental import pallas as pl
from jax.experimental.pallas import tpu as pltpu


# ----------------------------- Pallas kernel -----------------------------
def _make_kernel(total_rows, tile_rows, state_dim, inv_count):
    """Kernel closure over static sizes. Layout: batch on lanes (last axis)."""

    def kernel(
        s_ref,     # [state_dim,  TILE_B]  state^T tile   (stream dtype)
        a_ref,     # [action_dim, TILE_B]  action^T tile  (stream dtype)
        tgt_ref,   # [state_dim,  TILE_B]  target^T tile  (stream dtype)
        w1s_ref,   # [H, state_dim]   resident weights (f32)
        w1a_ref,   # [H, action_dim]
        b1_ref,    # [H, 1]
        w2_ref,    # [H, H]
        b2_ref,    # [H, 1]
        w3_ref,    # [state_dim, H]
        b3_ref,    # [state_dim, 1]
        out_ref,   # [1, 1] SMEM   final scalar MSE
        acc_ref,   # [1]    SMEM   running sum of squared diffs (scratch)
    ):
        i = pl.program_id(0)

        @pl.when(i == 0)
        def _init():
            acc_ref[0] = 0.0

        # Cast streamed tiles to f32 right after load (cheap; keeps VPU in f32).
        s = s_ref[...].astype(jnp.float32)
        a = a_ref[...].astype(jnp.float32)
        tgt = tgt_ref[...].astype(jnp.float32)

        # model(state, action): 2-hidden-layer MLP with ReLU.
        # First layer split (no concat): h = W1_s @ s^T + W1_a @ a^T + b1
        h = (jnp.dot(w1s_ref[...], s, preferred_element_type=jnp.float32)
             + jnp.dot(w1a_ref[...], a, preferred_element_type=jnp.float32)
             + b1_ref[...])                                  # [H, TILE_B]
        h = jnp.maximum(h, 0.0)
        h = jnp.dot(w2_ref[...], h, preferred_element_type=jnp.float32) + b2_ref[...]
        h = jnp.maximum(h, 0.0)
        pred = jnp.dot(w3_ref[...], h, preferred_element_type=jnp.float32) + b3_ref[...]

        diff = pred - tgt                                    # [state_dim, TILE_B]

        # Mask out the padded columns of a partial last tile.
        if total_rows % tile_rows != 0:
            valid = total_rows - i * tile_rows
            col = lax.broadcasted_iota(jnp.int32, (state_dim, tile_rows), 1)
            diff = jnp.where(col < valid, diff, 0.0)

        acc_ref[0] += jnp.sum(diff * diff)

        @pl.when(i == pl.num_programs(0) - 1)
        def _finalize():
            out_ref[0, 0] = acc_ref[0] * inv_count

    return kernel


# ----------------------------- wrapper -----------------------------------
def single_step_loss(params, state, action, target_state, *,
                     tile_rows=512, stream_dtype=jnp.float32):
    """Pallas equivalent of SingleStepLoss(MSELoss)(model, state, action, target)."""
    w1, b1, w2, b2, w3, b3 = params
    B, state_dim = target_state.shape
    action_dim = action.shape[-1]
    hidden = w1.shape[-1]
    in_dim = state_dim + action_dim

    # Lane-dense layout: batch on lanes.  (Layout plumbing only; in a training
    # loop the data/params would be stored in this layout up front.)
    s_t = state.T.astype(stream_dtype)            # [Ds, B]
    a_t = action.T.astype(stream_dtype)           # [Da, B]
    tgt_t = target_state.T.astype(stream_dtype)   # [Ds, B]

    # Split W1 (removes the concat) and pre-transpose all weights to [out, in].
    w1_s = w1[:state_dim, :].T.astype(jnp.float32)   # [H, Ds]
    w1_a = w1[state_dim:, :].T.astype(jnp.float32)   # [H, Da]
    w2_t = w2.T.astype(jnp.float32)                  # [H, H]
    w3_t = w3.T.astype(jnp.float32)                  # [Ds, H]
    b1_c = b1.reshape(hidden, 1).astype(jnp.float32)
    b2_c = b2.reshape(hidden, 1).astype(jnp.float32)
    b3_c = b3.reshape(state_dim, 1).astype(jnp.float32)

    # Tile size: lane dim must be a multiple of 128 or the full batch.
    if B <= tile_rows:
        tile_b = B
    else:
        tile_b = max(128, (tile_rows // 128) * 128)
    num_tiles = pl.cdiv(B, tile_b)

    stream_bytes = jnp.dtype(stream_dtype).itemsize
    flops = 2 * B * (in_dim * hidden + hidden * hidden + hidden * state_dim)
    bytes_accessed = (B * (2 * state_dim + action_dim) * stream_bytes
                      + 4 * (in_dim * hidden + hidden * hidden + hidden * state_dim
                             + 2 * hidden + state_dim) + 4)
    cost = pl.CostEstimate(flops=int(flops), transcendentals=0,
                           bytes_accessed=int(bytes_accessed))

    kernel = _make_kernel(B, tile_b, state_dim, 1.0 / float(B * state_dim))

    stream_s = pl.BlockSpec((state_dim, tile_b), lambda i: (0, i))
    stream_a = pl.BlockSpec((action_dim, tile_b), lambda i: (0, i))
    stream_t = pl.BlockSpec((state_dim, tile_b), lambda i: (0, i))
    const = lambda shape: pl.BlockSpec(shape, lambda i: (0, 0))   # resident weights

    loss = pl.pallas_call(
        kernel,
        out_shape=jax.ShapeDtypeStruct((1, 1), jnp.float32),
        grid=(num_tiles,),
        in_specs=[
            stream_s, stream_a, stream_t,
            const((hidden, state_dim)), const((hidden, action_dim)), const((hidden, 1)),
            const((hidden, hidden)), const((hidden, 1)),
            const((state_dim, hidden)), const((state_dim, 1)),
        ],
        out_specs=pl.BlockSpec(memory_space=pltpu.SMEM),
        scratch_shapes=[pltpu.SMEM((1,), jnp.float32)],
        compiler_params=pltpu.CompilerParams(dimension_semantics=("arbitrary",)),
        cost_estimate=cost,
    )(s_t, a_t, tgt_t, w1_s, w1_a, b1_c, w2_t, b2_c, w3_t, b3_c)
    return loss[0, 0]


def init_params(key, state_dim, action_dim, hidden):
    """Deterministic synthetic MLP dynamics-model parameters (x @ W + b layout)."""
    in_dim = state_dim + action_dim
    k1, k2, k3 = jax.random.split(key, 3)
    w1 = jax.random.normal(k1, (in_dim, hidden), jnp.float32) * 0.1
    b1 = jnp.zeros((1, hidden), jnp.float32)
    w2 = jax.random.normal(k2, (hidden, hidden), jnp.float32) * 0.1
    b2 = jnp.zeros((1, hidden), jnp.float32)
    w3 = jax.random.normal(k3, (hidden, state_dim), jnp.float32) * 0.1
    b3 = jnp.zeros((1, state_dim), jnp.float32)
    return (w1, b1, w2, b2, w3, b3)


# pure-JAX reference of the same forward, for correctness checks
def _reference_loss(params, state, action, target_state):
    w1, b1, w2, b2, w3, b3 = params
    x = jnp.concatenate([state, action], axis=-1)
    h = jnp.maximum(x @ w1 + b1, 0.0)
    h = jnp.maximum(h @ w2 + b2, 0.0)
    pred = h @ w3 + b3
    return jnp.mean((pred - target_state) ** 2)


if __name__ == "__main__":
    key = jax.random.PRNGKey(0)
    B, state_dim, action_dim, hidden = 8, 3, 3, 32

    k_p, k_s, k_a, k_t = jax.random.split(key, 4)
    params = init_params(k_p, state_dim, action_dim, hidden)
    state = jax.random.normal(k_s, (B, state_dim), jnp.float32)
    action = jax.random.normal(k_a, (B, action_dim), jnp.float32)
    target = jax.random.normal(k_t, (B, state_dim), jnp.float32)

    loss_fn = jax.jit(single_step_loss, static_argnames=("tile_rows", "stream_dtype"))

    # small batch (single tile)
    loss = jax.block_until_ready(loss_fn(params, state, action, target))
    ref = _reference_loss(params, state, action, target)
    assert jnp.allclose(loss, ref, rtol=1e-5, atol=2e-5), (loss, ref)

    # larger batch: exercises the grid, resident weights and the masked remainder tile
    B2 = 1000
    k_s2, k_a2, k_t2 = jax.random.split(jax.random.PRNGKey(1), 3)
    state2 = jax.random.normal(k_s2, (B2, state_dim), jnp.float32)
    action2 = jax.random.normal(k_a2, (B2, action_dim), jnp.float32)
    target2 = jax.random.normal(k_t2, (B2, state_dim), jnp.float32)
    loss2 = jax.block_until_ready(loss_fn(params, state2, action2, target2, tile_rows=512))
    ref2 = _reference_loss(params, state2, action2, target2)
    assert jnp.allclose(loss2, ref2, rtol=1e-5, atol=2e-5), (loss2, ref2)

    # bf16-streamed variant (v6e/v7x HBM-bandwidth optimization), loose tolerance
    loss3 = jax.block_until_ready(
        loss_fn(params, state2, action2, target2, tile_rows=512, stream_dtype=jnp.bfloat16))
    assert jnp.allclose(loss3, ref2, rtol=3e-2, atol=3e-2), (loss3, ref2)

    print("KERNEL_OK")
</pallas_src>

<mosaic_0001>
module attributes {stable_mosaic.version = 11 : i64} {
  func.func @kernel(%arg0: i32, %arg1: memref<3x8xf32, #tpu.memory_space<vmem>>, %arg2: memref<3x8xf32, #tpu.memory_space<vmem>>, %arg3: memref<3x8xf32, #tpu.memory_space<vmem>>, %arg4: memref<32x3xf32, #tpu.memory_space<vmem>>, %arg5: memref<32x3xf32, #tpu.memory_space<vmem>>, %arg6: memref<32x1xf32, #tpu.memory_space<vmem>>, %arg7: memref<32x32xf32, #tpu.memory_space<vmem>>, %arg8: memref<32x1xf32, #tpu.memory_space<vmem>>, %arg9: memref<3x32xf32, #tpu.memory_space<vmem>>, %arg10: memref<3x1xf32, #tpu.memory_space<vmem>>, %arg11: memref<1x1xf32, #tpu.memory_space<smem>>, %arg12: memref<1xf32, #tpu.memory_space<smem>>) attributes {dimension_semantics = [#tpu.dimension_semantics<arbitrary>], iteration_bounds = array<i64: 1>, scalar_prefetch = 0 : i64, scratch_operands = 1 : i64, tpu.core_type = #tpu.core_type<tc>, window_params = [{transform_indices = @transform_0, window_bounds = array<i64: 3, 8>}, {transform_indices = @transform_1, window_bounds = array<i64: 3, 8>}, {transform_indices = @transform_2, window_bounds = array<i64: 3, 8>}, {pipeline_mode = #tpu.pipeline_mode<synchronous>, transform_indices = @transform_3, window_bounds = array<i64: 32, 3>}, {pipeline_mode = #tpu.pipeline_mode<synchronous>, transform_indices = @transform_4, window_bounds = array<i64: 32, 3>}, {pipeline_mode = #tpu.pipeline_mode<synchronous>, transform_indices = @transform_5, window_bounds = array<i64: 32, 1>}, {pipeline_mode = #tpu.pipeline_mode<synchronous>, transform_indices = @transform_6, window_bounds = array<i64: 32, 32>}, {pipeline_mode = #tpu.pipeline_mode<synchronous>, transform_indices = @transform_7, window_bounds = array<i64: 32, 1>}, {pipeline_mode = #tpu.pipeline_mode<synchronous>, transform_indices = @transform_8, window_bounds = array<i64: 3, 32>}, {pipeline_mode = #tpu.pipeline_mode<synchronous>, transform_indices = @transform_9, window_bounds = array<i64: 3, 1>}, {transform_indices = @transform_10, window_bounds = array<i64: 1, 1>}]} {
    %c0_i32 = arith.constant 0 : i32
    %0 = arith.cmpi eq, %arg0, %c0_i32 : i32
    %1 = arith.extui %0 : i1 to i32
    %c0_i32_0 = arith.constant 0 : i32
    %2 = arith.cmpi ne, %1, %c0_i32_0 : i32
    scf.if %2 {
      %cst_30 = arith.constant 0.000000e+00 : f32
      %c0_31 = arith.constant 0 : index
      %40 = memref.load %arg12[%c0_31] : memref<1xf32, #tpu.memory_space<smem>>
      memref.store %cst_30, %arg12[%c0_31] : memref<1xf32, #tpu.memory_space<smem>>
    } else {
    }
    %c0 = arith.constant 0 : index
    %c0_1 = arith.constant 0 : index
    %3 = vector.load %arg1[%c0, %c0_1] : memref<3x8xf32, #tpu.memory_space<vmem>>, vector<3x8xf32>
    %c0_2 = arith.constant 0 : index
    %c0_3 = arith.constant 0 : index
    %4 = vector.load %arg2[%c0_2, %c0_3] : memref<3x8xf32, #tpu.memory_space<vmem>>, vector<3x8xf32>
    %c0_4 = arith.constant 0 : index
    %c0_5 = arith.constant 0 : index
    %5 = vector.load %arg3[%c0_4, %c0_5] : memref<3x8xf32, #tpu.memory_space<vmem>>, vector<3x8xf32>
    %c0_6 = arith.constant 0 : index
    %c0_7 = arith.constant 0 : index
    %6 = vector.load %arg4[%c0_6, %c0_7] : memref<32x3xf32, #tpu.memory_space<vmem>>, vector<32x3xf32>
    %cst = arith.constant dense<0.000000e+00> : vector<32x8xf32>
    %7 = tpu.matmul %6, %3, %cst {dimension_numbers = #tpu.dot_dimension_numbers<[1], [0], [0], [1], [0, 0, 1, 1], [], []>} : vector<32x3xf32>, vector<3x8xf32>, vector<32x8xf32> -> vector<32x8xf32>
    %c0_8 = arith.constant 0 : index
    %c0_9 = arith.constant 0 : index
    %8 = vector.load %arg5[%c0_8, %c0_9] : memref<32x3xf32, #tpu.memory_space<vmem>>, vector<32x3xf32>
    %cst_10 = arith.constant dense<0.000000e+00> : vector<32x8xf32>
    %9 = tpu.matmul %8, %4, %cst_10 {dimension_numbers = #tpu.dot_dimension_numbers<[1], [0], [0], [1], [0, 0, 1, 1], [], []>} : vector<32x3xf32>, vector<3x8xf32>, vector<32x8xf32> -> vector<32x8xf32>
    %10 = arith.addf %7, %9 : vector<32x8xf32>
    %c0_11 = arith.constant 0 : index
    %c0_12 = arith.constant 0 : index
    %11 = vector.load %arg6[%c0_11, %c0_12] : memref<32x1xf32, #tpu.memory_space<vmem>>, vector<32x1xf32>
    %12 = vector.broadcast %11 : vector<32x1xf32> to vector<32x8xf32>
    %13 = arith.addf %10, %12 : vector<32x8xf32>
    %cst_13 = arith.constant 0.000000e+00 : f32
    %14 = vector.broadcast %cst_13 : f32 to vector<32x8xf32>
    %15 = arith.maximumf %13, %14 : vector<32x8xf32>
    %c0_14 = arith.constant 0 : index
    %c0_15 = arith.constant 0 : index
    %16 = vector.load %arg7[%c0_14, %c0_15] : memref<32x32xf32, #tpu.memory_space<vmem>>, vector<32x32xf32>
    %cst_16 = arith.constant dense<0.000000e+00> : vector<32x8xf32>
    %17 = tpu.matmul %16, %15, %cst_16 {dimension_numbers = #tpu.dot_dimension_numbers<[1], [0], [0], [1], [0, 0, 1, 1], [], []>} : vector<32x32xf32>, vector<32x8xf32>, vector<32x8xf32> -> vector<32x8xf32>
    %c0_17 = arith.constant 0 : index
    %c0_18 = arith.constant 0 : index
    %18 = vector.load %arg8[%c0_17, %c0_18] : memref<32x1xf32, #tpu.memory_space<vmem>>, vector<32x1xf32>
    %19 = vector.broadcast %18 : vector<32x1xf32> to vector<32x8xf32>
    %20 = arith.addf %17, %19 : vector<32x8xf32>
    %cst_19 = arith.constant 0.000000e+00 : f32
    %21 = vector.broadcast %cst_19 : f32 to vector<32x8xf32>
    %22 = arith.maximumf %20, %21 : vector<32x8xf32>
    %c0_20 = arith.constant 0 : index
    %c0_21 = arith.constant 0 : index
    %23 = vector.load %arg9[%c0_20, %c0_21] : memref<3x32xf32, #tpu.memory_space<vmem>>, vector<3x32xf32>
    %cst_22 = arith.constant dense<0.000000e+00> : vector<3x8xf32>
    %24 = tpu.matmul %23, %22, %cst_22 {dimension_numbers = #tpu.dot_dimension_numbers<[1], [0], [0], [1], [0, 0, 1, 1], [], []>} : vector<3x32xf32>, vector<32x8xf32>, vector<3x8xf32> -> vector<3x8xf32>
    %c0_23 = arith.constant 0 : index
    %c0_24 = arith.constant 0 : index
    %25 = vector.load %arg10[%c0_23, %c0_24] : memref<3x1xf32, #tpu.memory_space<vmem>>, vector<3x1xf32>
    %26 = vector.broadcast %25 : vector<3x1xf32> to vector<3x8xf32>
    %27 = arith.addf %24, %26 : vector<3x8xf32>
    %28 = arith.subf %27, %5 : vector<3x8xf32>
    %c0_25 = arith.constant 0 : index
    %29 = memref.load %arg12[%c0_25] : memref<1xf32, #tpu.memory_space<smem>>
    %30 = arith.mulf %28, %28 : vector<3x8xf32>
    %31 = vector.shape_cast %30 : vector<3x8xf32> to vector<1x3x8xf32>
    %cst_26 = arith.constant dense<0.000000e+00> : vector<1xf32>
    %32 = vector.multi_reduction <add>, %31, %cst_26 [1, 2] : vector<1x3x8xf32> to vector<1xf32>
    %33 = vector.shape_cast %32 : vector<1xf32> to vector<1x1x1xf32>
    %34 = vector.extract %33[0, 0, 0] : f32 from vector<1x1x1xf32>
    %35 = arith.addf %29, %34 : f32
    %c0_27 = arith.constant 0 : index
    %36 = memref.load %arg12[%c0_27] : memref<1xf32, #tpu.memory_space<smem>>
    memref.store %35, %arg12[%c0_27] : memref<1xf32, #tpu.memory_space<smem>>
    %c0_i32_28 = arith.constant 0 : i32
    %37 = arith.cmpi eq, %arg0, %c0_i32_28 : i32
    %38 = arith.extui %37 : i1 to i32
    %c0_i32_29 = arith.constant 0 : i32
    %39 = arith.cmpi ne, %38, %c0_i32_29 : i32
    scf.if %39 {
      %c0_30 = arith.constant 0 : index
      %40 = memref.load %arg12[%c0_30] : memref<1xf32, #tpu.memory_space<smem>>
      %cst_31 = arith.constant 0.0416666679 : f32
      %41 = arith.mulf %40, %cst_31 : f32
      %c0_32 = arith.constant 0 : index
      %c0_33 = arith.constant 0 : index
      %42 = memref.load %arg11[%c0_32, %c0_33] : memref<1x1xf32, #tpu.memory_space<smem>>
      memref.store %41, %arg11[%c0_32, %c0_33] : memref<1x1xf32, #tpu.memory_space<smem>>
    } else {
    }
    return
  }
  func.func @transform_0(%arg0: i32) -> (i32, i32) {
    %c0_i32 = arith.constant 0 : i32
    %c0_i32_0 = arith.constant 0 : i32
    return %c0_i32, %arg0 : i32, i32
  }
  func.func @transform_1(%arg0: i32) -> (i32, i32) {
    %c0_i32 = arith.constant 0 : i32
    %c0_i32_0 = arith.constant 0 : i32
    return %c0_i32, %arg0 : i32, i32
  }
  func.func @transform_2(%arg0: i32) -> (i32, i32) {
    %c0_i32 = arith.constant 0 : i32
    %c0_i32_0 = arith.constant 0 : i32
    return %c0_i32, %arg0 : i32, i32
  }
  func.func @transform_3(%arg0: i32) -> (i32, i32) {
    %c0_i32 = arith.constant 0 : i32
    %c0_i32_0 = arith.constant 0 : i32
    %c0_i32_1 = arith.constant 0 : i32
    return %c0_i32, %c0_i32_0 : i32, i32
  }
  func.func @transform_4(%arg0: i32) -> (i32, i32) {
    %c0_i32 = arith.constant 0 : i32
    %c0_i32_0 = arith.constant 0 : i32
    %c0_i32_1 = arith.constant 0 : i32
    return %c0_i32, %c0_i32_0 : i32, i32
  }
  func.func @transform_5(%arg0: i32) -> (i32, i32) {
    %c0_i32 = arith.constant 0 : i32
    %c0_i32_0 = arith.constant 0 : i32
    %c0_i32_1 = arith.constant 0 : i32
    return %c0_i32, %c0_i32_0 : i32, i32
  }
  func.func @transform_6(%arg0: i32) -> (i32, i32) {
    %c0_i32 = arith.constant 0 : i32
    %c0_i32_0 = arith.constant 0 : i32
    %c0_i32_1 = arith.constant 0 : i32
    return %c0_i32, %c0_i32_0 : i32, i32
  }
  func.func @transform_7(%arg0: i32) -> (i32, i32) {
    %c0_i32 = arith.constant 0 : i32
    %c0_i32_0 = arith.constant 0 : i32
    %c0_i32_1 = arith.constant 0 : i32
    return %c0_i32, %c0_i32_0 : i32, i32
  }
  func.func @transform_8(%arg0: i32) -> (i32, i32) {
    %c0_i32 = arith.constant 0 : i32
    %c0_i32_0 = arith.constant 0 : i32
    %c0_i32_1 = arith.constant 0 : i32
    return %c0_i32, %c0_i32_0 : i32, i32
  }
  func.func @transform_9(%arg0: i32) -> (i32, i32) {
    %c0_i32 = arith.constant 0 : i32
    %c0_i32_0 = arith.constant 0 : i32
    %c0_i32_1 = arith.constant 0 : i32
    return %c0_i32, %c0_i32_0 : i32, i32
  }
  func.func @transform_10(%arg0: i32) -> (i32, i32) {
    %c0_i32 = arith.constant 0 : i32
    %c0_i32_0 = arith.constant 0 : i32
    %c0_i32_1 = arith.constant 0 : i32
    return %c0_i32, %c0_i32_0 : i32, i32
  }
}

</mosaic_0001>

<llo_original>
// kernel: single_step_loss.1
$region0: #{single_step_loss.1}
  #allocation0 [shape = 'u32[]', space=smem, size = 0x4, offset = 0x4, fixed_abs, tag = 'smem constant byte address 0x4 - core index']
  #allocation1 [shape = 'u32[144,128]{1,0:T(1,128)}', space=vmem, size = 0x12000, scoped, tag = 'internal scratch']
  #allocation2 [shape = 'f32[1]{0:T(128)}', space=smem, size = 0x200, scoped, tag = 'scratch operand']
  %s0 = inlined_call_operand.vmem [shape: f32[3,8], index: 0, kind: input, shape index: {}]
  %s1 = inlined_call_operand.vmem [shape: f32[3,8], index: 1, kind: input, shape index: {}]
  %s2 = inlined_call_operand.vmem [shape: f32[3,8], index: 2, kind: input, shape index: {}]
  %s3 = inlined_call_operand.vmem [shape: f32[32,3], index: 3, kind: input, shape index: {}]
  %s4 = inlined_call_operand.vmem [shape: f32[32,3], index: 4, kind: input, shape index: {}]
  %s5 = inlined_call_operand.vmem [shape: f32[32,1], index: 5, kind: input, shape index: {}]
  %s6 = inlined_call_operand.vmem [shape: f32[32,32], index: 6, kind: input, shape index: {}]
  %s7 = inlined_call_operand.vmem [shape: f32[32,1], index: 7, kind: input, shape index: {}]
  %s8 = inlined_call_operand.vmem [shape: f32[3,32], index: 8, kind: input, shape index: {}]
  %s9 = inlined_call_operand.vmem [shape: f32[3,1], index: 9, kind: input, shape index: {}]
  %s10 = inlined_call_operand.hbm [shape: f32[1,1], index: 10, kind: output, shape index: {}]
  %s11 = sld [smem:[#allocation0]]
  $region58: #{single_step_loss.1} parent=0
    _
  %s13 = ssub.s32 1, %s11
  %s14 = scalar_select 0, %s13, %s11
  $region1: #{single_step_loss.1} parent=0
    #allocation3 [shape = 'u8[512]{0}', space=smem, size = 0x200, scoped, tag = 'output window, operand 0, single buffered']
    #allocation4 [shape = 's32[1]{0}', space=sflag, size = 0x4, scoped, tag = 'scoped memory for single_step_loss.1']
    %15 = vsyncpa [#allocation4], 0
    // Predicated region
    $region2: #{single_step_loss.1} parent=1 // pred_check
      _
    $region3: #{single_step_loss.1} parent=1 // pred_check_branch
      %17 = sbr.rel (0) target = $region5
    $region4: #{single_step_loss.1} parent=1 // pred_region
      _
    $region5: #{single_step_loss.1} parent=1 // pred_fallthru
      _
    // Predicated region
    $region6: #{single_step_loss.1} parent=1 // pred_check
      _
    $region7: #{single_step_loss.1} parent=1 // pred_check_branch
      %19 = sbr.rel (0) target = $region9
    $region8: #{single_step_loss.1} parent=1 // pred_region
      _
    $region9: #{single_step_loss.1} parent=1 // pred_fallthru
      _
    // Predicated region
    $region10: #{single_step_loss.1} parent=1 // pred_check
      _
    $region11: #{single_step_loss.1} parent=1 // pred_check_branch
      %21 = sbr.rel (0) target = $region13
    $region12: #{single_step_loss.1} parent=1 // pred_region
      _
    $region13: #{single_step_loss.1} parent=1 // pred_fallthru
      _
    // Predicated region
    $region14: #{single_step_loss.1} parent=1 // pred_check
      _
    $region15: #{single_step_loss.1} parent=1 // pred_check_branch
      %23 = sbr.rel (0) target = $region17
    $region16: #{single_step_loss.1} parent=1 // pred_region
      _
    $region17: #{single_step_loss.1} parent=1 // pred_fallthru
      _
    // Predicated region
    $region18: #{single_step_loss.1} parent=1 // pred_check
      _
    $region19: #{single_step_loss.1} parent=1 // pred_check_branch
      %25 = sbr.rel (0) target = $region21
    $region20: #{single_step_loss.1} parent=1 // pred_region
      _
    $region21: #{single_step_loss.1} parent=1 // pred_fallthru
      _
    // Predicated region
    $region22: #{single_step_loss.1} parent=1 // pred_check
      _
    $region23: #{single_step_loss.1} parent=1 // pred_check_branch
      %27 = sbr.rel (0) target = $region25
    $region24: #{single_step_loss.1} parent=1 // pred_region
      _
    $region25: #{single_step_loss.1} parent=1 // pred_fallthru
      _
    // Predicated region
    $region26: #{single_step_loss.1} parent=1 // pred_check
      _
    $region27: #{single_step_loss.1} parent=1 // pred_check_branch
      %29 = sbr.rel (0) target = $region29
    $region28: #{single_step_loss.1} parent=1 // pred_region
      _
    $region29: #{single_step_loss.1} parent=1 // pred_fallthru
      _
    // Predicated region
    $region30: #{single_step_loss.1} parent=1 // pred_check
      _
    $region31: #{single_step_loss.1} parent=1 // pred_check_branch
      %31 = sbr.rel (0) target = $region33
    $region32: #{single_step_loss.1} parent=1 // pred_region
      _
    $region33: #{single_step_loss.1} parent=1 // pred_fallthru
      _
    // Predicated region
    $region34: #{single_step_loss.1} parent=1 // pred_check
      _
    $region35: #{single_step_loss.1} parent=1 // pred_check_branch
      %33 = sbr.rel (0) target = $region37
    $region36: #{single_step_loss.1} parent=1 // pred_region
      _
    $region37: #{single_step_loss.1} parent=1 // pred_fallthru
      _
    // Predicated region
    $region38: #{single_step_loss.1} parent=1 // pred_check
      _
    $region39: #{single_step_loss.1} parent=1 // pred_check_branch
      %35 = sbr.rel (0) target = $region41
    $region40: #{single_step_loss.1} parent=1 // pred_region
      _
    $region41: #{single_step_loss.1} parent=1 // pred_fallthru
      _
    %p36 = scmp.eq.s32.totalorder 0, 0
    // Predicated region
    $region42: #{single_step_loss.1} parent=1 // pred_check
      %p37 = pneg %p36
    $region43: #{single_step_loss.1} parent=1 // pred_check_branch
      %39 = sbr.rel (%p37) target = $region45
    $region44: #{single_step_loss.1} parent=1 // pred_region
      %s40 = scalar_lea.smem [#allocation2], 0
      %41 = sst [smem:[%s40]] 0.0
    $region45: #{single_step_loss.1} parent=1 // pred_fallthru
      _
    %v42 = vld [vmem:[%s0] sm:$0x7]
    %v43 = vld [vmem:[%s1] sm:$0x7]
    %v44 = vld [vmem:[%s2] sm:$0x7]
    %v45 = vld [vmem:[%s3] sm:$0xff]
    %v46 = vld [vmem:[%s3 + $0x8] sm:$0xff]
    %v47 = vld [vmem:[%s3 + $0x10] sm:$0xff]
    %v48 = vld [vmem:[%s3 + $0x18] sm:$0xff]
    %v49 = vld [vmem:[%s4] sm:$0xff]
    %v50 = vld [vmem:[%s4 + $0x8] sm:$0xff]
    %v51 = vld [vmem:[%s4 + $0x10] sm:$0xff]
    %v52 = vld [vmem:[%s4 + $0x18] sm:$0xff]
    %vm53 = vcmask 23552
    %v55 = vsel %vm53, %v49, 0
    %v58 = vsel %vm53, %v50, 0
    %v61 = vsel %vm53, %v51, 0
    %v64 = vsel %vm53, %v52, 0
    %vm66 = vcmask 1042432
    %v68 = vsel %vm66, %v43, 0
    %70 = vmatprep.subr.mxu0 0.0
    %71 = vmatpush1.msra.mxu0 0.0
    %72 = vmatprep.subr.mxu0 0.0
    %73 = vmatpush1.msra.mxu0 0.0
    %74 = vmatprep.subr.mxu0 0.0
    %75 = vmatpush1.msra.mxu0 0.0
    %76 = vmatprep.subr.mxu0 0.0
    %77 = vmatpush1.msra.mxu0 0.0
    %78 = vmatprep.subr.mxu0 0.0
    %79 = vmatpush1.msra.mxu0 0.0
    %80 = vmatprep.subr.mxu0 0.0
    %81 = vmatpush1.msra.mxu0 0.0
    %82 = vmatprep.subr.mxu0 0.0
    %83 = vmatpush1.msra.mxu0 0.0
    %84 = vmatprep.subr.mxu0 0.0
    %85 = vmatpush1.msra.mxu0 0.0
    %86 = vmatprep.subr.mxu0 0.0
    %87 = vmatpush1.msra.mxu0 0.0
    %88 = vmatprep.subr.mxu0 0.0
    %89 = vmatpush1.msra.mxu0 0.0
    %90 = vmatprep.subr.mxu0 0.0
    %91 = vmatpush1.msra.mxu0 0.0
    %92 = vmatprep.subr.mxu0 0.0
    %93 = vmatpush1.msra.mxu0 0.0
    %94 = vmatprep.subr.mxu0 0.0
    %95 = vmatpush1.msra.mxu0 0.0
    %96 = vmatprep.subr.mxu0 0.0
    %97 = vmatpush1.msra.mxu0 0.0
    %98 = vmatprep.subr.mxu0 0.0
    %99 = vmatpush1.msra.mxu0 0.0
    %100 = vmatprep.subr.mxu0 0.0
    %101 = vmatpush1.msra.mxu0 %v68
    %102 = vmatprep.subr.mxu0 0.0
    %103 = vmatpush2.msra.mxu0 0.0
    %104 = vmatprep.subr.mxu0 0.0
    %105 = vmatpush2.msra.mxu0 0.0
    %106 = vmatprep.subr.mxu0 0.0
    %107 = vmatpush2.msra.mxu0 0.0
    %108 = vmatprep.subr.mxu0 0.0
    %109 = vmatpush2.msra.mxu0 0.0
    %110 = vmatprep.subr.mxu0 0.0
    %111 = vmatpush2.msra.mxu0 0.0
    %112 = vmatprep.subr.mxu0 0.0
    %113 = vmatpush2.msra.mxu0 0.0
    %114 = vmatprep.subr.mxu0 0.0
    %115 = vmatpush2.msra.mxu0 0.0
    %116 = vmatprep.subr.mxu0 0.0
    %117 = vmatpush2.msra.mxu0 0.0
    %118 = vmatprep.subr.mxu0 0.0
    %119 = vmatpush2.msra.mxu0 0.0
    %120 = vmatprep.subr.mxu0 0.0
    %121 = vmatpush2.msra.mxu0 0.0
    %122 = vmatprep.subr.mxu0 0.0
    %123 = vmatpush2.msra.mxu0 0.0
    %124 = vmatprep.subr.mxu0 0.0
    %125 = vmatpush2.msra.mxu0 0.0
    %126 = vmatprep.subr.mxu0 0.0
    %127 = vmatpush2.msra.mxu0 0.0
    %128 = vmatprep.subr.mxu0 0.0
    %129 = vmatpush2.msra.mxu0 0.0
    %130 = vmatprep.subr.mxu0 0.0
    %131 = vmatpush2.msra.mxu0 0.0
    %132 = vmatprep.subr.mxu0 0.0
    %133 = vmatpush2.msra.mxu0 0.0
    %134 = vmatprep.mubr.f32.mxu0 0.0
    %135 = vmatmul.mubr.f32.gmra.mxu0 %v55
    %v136 = vpop.f32.mrf.mxu0
    %v137 = vadd.f32 0.0, %v136
    %v138 = vpop.f32.mrf.mxu0
    %139 = vmatprep.mubr.f32.mxu0 0.0
    %140 = vmatmul.mubr.f32.gmra.mxu0 %v58
    %v141 = vpop.f32.mrf.mxu0
    %v142 = vadd.f32 0.0, %v141
    %v143 = vpop.f32.mrf.mxu0
    %144 = vmatprep.mubr.f32.mxu0 0.0
    %145 = vmatmul.mubr.f32.gmra.mxu0 %v61
    %v146 = vpop.f32.mrf.mxu0
    %v147 = vadd.f32 0.0, %v146
    %v148 = vpop.f32.mrf.mxu0
    %149 = vmatprep.mubr.f32.mxu0 0.0
    %150 = vmatmul.mubr.f32.gmra.mxu0 %v64
    %v151 = vpop.f32.mrf.mxu0
    %v152 = vadd.f32 0.0, %v151
    %v153 = vpop.f32.mrf.mxu0
    %154 = vdwg.mxu0
    %v156 = vsel %vm53, %v45, 0
    %v159 = vsel %vm53, %v46, 0
    %v162 = vsel %vm53, %v47, 0
    %v165 = vsel %vm53, %v48, 0
    %v168 = vsel %vm66, %v42, 0
    %170 = vmatprep.subr.mxu0 0.0
    %171 = vmatpush1.msra.mxu0 0.0
    %172 = vmatprep.subr.mxu0 0.0
    %173 = vmatpush1.msra.mxu0 0.0
    %174 = vmatprep.subr.mxu0 0.0
    %175 = vmatpush1.msra.mxu0 0.0
    %176 = vmatprep.subr.mxu0 0.0
    %177 = vmatpush1.msra.mxu0 0.0
    %178 = vmatprep.subr.mxu0 0.0
    %179 = vmatpush1.msra.mxu0 0.0
    %180 = vmatprep.subr.mxu0 0.0
    %181 = vmatpush1.msra.mxu0 0.0
    %182 = vmatprep.subr.mxu0 0.0
    %183 = vmatpush1.msra.mxu0 0.0
    %184 = vmatprep.subr.mxu0 0.0
    %185 = vmatpush1.msra.mxu0 0.0
    %186 = vmatprep.subr.mxu0 0.0
    %187 = vmatpush1.msra.mxu0 0.0
    %188 = vmatprep.subr.mxu0 0.0
    %189 = vmatpush1.msra.mxu0 0.0
    %190 = vmatprep.subr.mxu0 0.0
    %191 = vmatpush1.msra.mxu0 0.0
    %192 = vmatprep.subr.mxu0 0.0
    %193 = vmatpush1.msra.mxu0 0.0
    %194 = vmatprep.subr.mxu0 0.0
    %195 = vmatpush1.msra.mxu0 0.0
    %196 = vmatprep.subr.mxu0 0.0
    %197 = vmatpush1.msra.mxu0 0.0
    %198 = vmatprep.subr.mxu0 0.0
    %199 = vmatpush1.msra.mxu0 0.0
    %200 = vmatprep.subr.mxu0 0.0
    %201 = vmatpush1.msra.mxu0 %v168
    %202 = vmatprep.subr.mxu0 0.0
    %203 = vmatpush2.msra.mxu0 0.0
    %204 = vmatprep.subr.mxu0 0.0
    %205 = vmatpush2.msra.mxu0 0.0
    %206 = vmatprep.subr.mxu0 0.0
    %207 = vmatpush2.msra.mxu0 0.0
    %208 = vmatprep.subr.mxu0 0.0
    %209 = vmatpush2.msra.mxu0 0.0
    %210 = vmatprep.subr.mxu0 0.0
    %211 = vmatpush2.msra.mxu0 0.0
    %212 = vmatprep.subr.mxu0 0.0
    %213 = vmatpush2.msra.mxu0 0.0
    %214 = vmatprep.subr.mxu0 0.0
    %215 = vmatpush2.msra.mxu0 0.0
    %216 = vmatprep.subr.mxu0 0.0
    %217 = vmatpush2.msra.mxu0 0.0
    %218 = vmatprep.subr.mxu0 0.0
    %219 = vmatpush2.msra.mxu0 0.0
    %220 = vmatprep.subr.mxu0 0.0
    %221 = vmatpush2.msra.mxu0 0.0
    %222 = vmatprep.subr.mxu0 0.0
    %223 = vmatpush2.msra.mxu0 0.0
    %224 = vmatprep.subr.mxu0 0.0
    %225 = vmatpush2.msra.mxu0 0.0
    %226 = vmatprep.subr.mxu0 0.0
    %227 = vmatpush2.msra.mxu0 0.0
    %228 = vmatprep.subr.mxu0 0.0
    %229 = vmatpush2.msra.mxu0 0.0
    %230 = vmatprep.subr.mxu0 0.0
    %231 = vmatpush2.msra.mxu0 0.0
    %232 = vmatprep.subr.mxu0 0.0
    %233 = vmatpush2.msra.mxu0 0.0
    %234 = vmatprep.mubr.f32.mxu0 0.0
    %235 = vmatmul.mubr.f32.gmra.mxu0 %v156
    %v236 = vpop.f32.mrf.mxu0
    %v237 = vadd.f32 %v137, %v236
    %v238 = vpop.f32.mrf.mxu0
    %239 = vmatprep.mubr.f32.mxu0 0.0
    %240 = vmatmul.mubr.f32.gmra.mxu0 %v159
    %v241 = vpop.f32.mrf.mxu0
    %v242 = vadd.f32 %v142, %v241
    %v243 = vpop.f32.mrf.mxu0
    %244 = vmatprep.mubr.f32.mxu0 0.0
    %245 = vmatmul.mubr.f32.gmra.mxu0 %v162
    %v246 = vpop.f32.mrf.mxu0
    %v247 = vadd.f32 %v147, %v246
    %v248 = vpop.f32.mrf.mxu0
    %249 = vmatprep.mubr.f32.mxu0 0.0
    %250 = vmatmul.mubr.f32.gmra.mxu0 %v165
    %v251 = vpop.f32.mrf.mxu0
    %v252 = vadd.f32 %v152, %v251
    %v253 = vpop.f32.mrf.mxu0
    %254 = vdwg.mxu0
    %v255 = vld [vmem:[%s5] sm:$0xff]
    %v256 = vld [vmem:[%s5 + $0x8] sm:$0xff]
    %v257 = vld [vmem:[%s5 + $0x10] sm:$0xff]
    %v258 = vld [vmem:[%s5 + $0x18] sm:$0xff]
    %260 = vset.pattern.permute.xlu0 0
    %261 = vperm.xlu0 %260, %v255
    %v262 = vpop.permute.xlu0 %261
    %265 = vset.pattern.permute.xlu0 0
    %266 = vperm.xlu0 %265, %v256
    %v267 = vpop.permute.xlu0 %266
    %270 = vset.pattern.permute.xlu0 0
    %271 = vperm.xlu0 %270, %v257
    %v272 = vpop.permute.xlu0 %271
    %275 = vset.pattern.permute.xlu0 0
    %276 = vperm.xlu0 %275, %v258
    %v277 = vpop.permute.xlu0 %276
    %v279 = vadd.f32 %v237, %v262
    %v280 = vadd.f32 %v242, %v267
    %v281 = vadd.f32 %v247, %v272
    %v282 = vadd.f32 %v252, %v277
    %v283 = vmax.f32 %v279, 0.0
    %v284 = vmax.f32 %v280, 0.0
    %v285 = vmax.f32 %v281, 0.0
    %v286 = vmax.f32 %v282, 0.0
    %v287 = vld [vmem:[%s6] sm:$0xff]
    %v288 = vld [vmem:[%s6 + $0x8] sm:$0xff]
    %v289 = vld [vmem:[%s6 + $0x10] sm:$0xff]
    %v290 = vld [vmem:[%s6 + $0x18] sm:$0xff]
    %v291 = vld [vmem:[%s7] sm:$0xff]
    %v292 = vld [vmem:[%s7 + $0x8] sm:$0xff]
    %v293 = vld [vmem:[%s7 + $0x10] sm:$0xff]
    %v294 = vld [vmem:[%s7 + $0x18] sm:$0xff]
    %296 = vset.pattern.permute.xlu0 0
    %297 = vperm.xlu0 %296, %v291
    %v298 = vpop.permute.xlu0 %297
    %301 = vset.pattern.permute.xlu0 0
    %302 = vperm.xlu0 %301, %v292
    %v303 = vpop.permute.xlu0 %302
    %306 = vset.pattern.permute.xlu0 0
    %307 = vperm.xlu0 %306, %v293
    %v308 = vpop.permute.xlu0 %307
    %311 = vset.pattern.permute.xlu0 0
    %312 = vperm.xlu0 %311, %v294
    %v313 = vpop.permute.xlu0 %312
    %vm315 = vcmask 261120
    %v317 = vsel %vm315, %v287, 0
    %v320 = vsel %vm315, %v288, 0
    %v323 = vsel %vm315, %v289, 0
    %v326 = vsel %vm315, %v290, 0
    %328 = vmatprep.subr.mxu0 0.0
    %329 = vmatpush1.msra.mxu0 0.0
    %330 = vmatprep.subr.mxu0 0.0
    %331 = vmatpush1.msra.mxu0 0.0
    %332 = vmatprep.subr.mxu0 0.0
    %333 = vmatpush1.msra.mxu0 0.0
    %334 = vmatprep.subr.mxu0 0.0
    %335 = vmatpush1.msra.mxu0 0.0
    %336 = vmatprep.subr.mxu0 0.0
    %337 = vmatpush1.msra.mxu0 0.0
    %338 = vmatprep.subr.mxu0 0.0
    %339 = vmatpush1.msra.mxu0 0.0
    %340 = vmatprep.subr.mxu0 0.0
    %341 = vmatpush1.msra.mxu0 0.0
    %342 = vmatprep.subr.mxu0 0.0
    %343 = vmatpush1.msra.mxu0 0.0
    %344 = vmatprep.subr.mxu0 0.0
    %345 = vmatpush1.msra.mxu0 0.0
    %346 = vmatprep.subr.mxu0 0.0
    %347 = vmatpush1.msra.mxu0 0.0
    %348 = vmatprep.subr.mxu0 0.0
    %349 = vmatpush1.msra.mxu0 0.0
    %350 = vmatprep.subr.mxu0 0.0
    %351 = vmatpush1.msra.mxu0 0.0
    %352 = vmatprep.subr.mxu0 0.0
    %353 = vmatpush1.msra.mxu0 %v286
    %354 = vmatprep.subr.mxu0 0.0
    %355 = vmatpush1.msra.mxu0 %v285
    %356 = vmatprep.subr.mxu0 0.0
    %357 = vmatpush1.msra.mxu0 %v284
    %358 = vmatprep.subr.mxu0 0.0
    %359 = vmatpush1.msra.mxu0 %v283
    %360 = vmatprep.subr.mxu0 0.0
    %361 = vmatpush2.msra.mxu0 0.0
    %362 = vmatprep.subr.mxu0 0.0
    %363 = vmatpush2.msra.mxu0 0.0
    %364 = vmatprep.subr.mxu0 0.0
    %365 = vmatpush2.msra.mxu0 0.0
    %366 = vmatprep.subr.mxu0 0.0
    %367 = vmatpush2.msra.mxu0 0.0
    %368 = vmatprep.subr.mxu0 0.0
    %369 = vmatpush2.msra.mxu0 0.0
    %370 = vmatprep.subr.mxu0 0.0
    %371 = vmatpush2.msra.mxu0 0.0
    %372 = vmatprep.subr.mxu0 0.0
    %373 = vmatpush2.msra.mxu0 0.0
    %374 = vmatprep.subr.mxu0 0.0
    %375 = vmatpush2.msra.mxu0 0.0
    %376 = vmatprep.subr.mxu0 0.0
    %377 = vmatpush2.msra.mxu0 0.0
    %378 = vmatprep.subr.mxu0 0.0
    %379 = vmatpush2.msra.mxu0 0.0
    %380 = vmatprep.subr.mxu0 0.0
    %381 = vmatpush2.msra.mxu0 0.0
    %382 = vmatprep.subr.mxu0 0.0
    %383 = vmatpush2.msra.mxu0 0.0
    %384 = vmatprep.subr.mxu0 0.0
    %385 = vmatpush2.msra.mxu0 0.0
    %386 = vmatprep.subr.mxu0 0.0
    %387 = vmatpush2.msra.mxu0 0.0
    %388 = vmatprep.subr.mxu0 0.0
    %389 = vmatpush2.msra.mxu0 0.0
    %390 = vmatprep.subr.mxu0 0.0
    %391 = vmatpush2.msra.mxu0 0.0
    %392 = vmatprep.mubr.f32.mxu0 0.0
    %393 = vmatmul.mubr.f32.gmra.mxu0 %v317
    %v394 = vpop.f32.mrf.mxu0
    %v395 = vadd.f32 %v298, %v394
    %v396 = vpop.f32.mrf.mxu0
    %397 = vmatprep.mubr.f32.mxu0 0.0
    %398 = vmatmul.mubr.f32.gmra.mxu0 %v320
    %v399 = vpop.f32.mrf.mxu0
    %v400 = vadd.f32 %v303, %v399
    %v401 = vpop.f32.mrf.mxu0
    %402 = vmatprep.mubr.f32.mxu0 0.0
    %403 = vmatmul.mubr.f32.gmra.mxu0 %v323
    %v404 = vpop.f32.mrf.mxu0
    %v405 = vadd.f32 %v308, %v404
    %v406 = vpop.f32.mrf.mxu0
    %407 = vmatprep.mubr.f32.mxu0 0.0
    %408 = vmatmul.mubr.f32.gmra.mxu0 %v326
    %v409 = vpop.f32.mrf.mxu0
    %v410 = vadd.f32 %v313, %v409
    %v411 = vpop.f32.mrf.mxu0
    %412 = vdwg.mxu0
    %v413 = vmax.f32 %v395, 0.0
    %v414 = vmax.f32 %v400, 0.0
    %v415 = vmax.f32 %v405, 0.0
    %v416 = vmax.f32 %v410, 0.0
    %v417 = vld [vmem:[%s8] sm:$0x7]
    %v418 = vld [vmem:[%s9] sm:$0x7]
    %420 = vset.pattern.permute.xlu0 0
    %421 = vperm.xlu0 %420, %v418
    %v422 = vpop.permute.xlu0 %421
    %v425 = vsel %vm315, %v417, 0
    %427 = vmatprep.subr.mxu0 0.0
    %428 = vmatpush1.msra.mxu0 0.0
    %429 = vmatprep.subr.mxu0 0.0
    %430 = vmatpush1.msra.mxu0 0.0
    %431 = vmatprep.subr.mxu0 0.0
    %432 = vmatpush1.msra.mxu0 0.0
    %433 = vmatprep.subr.mxu0 0.0
    %434 = vmatpush1.msra.mxu0 0.0
    %435 = vmatprep.subr.mxu0 0.0
    %436 = vmatpush1.msra.mxu0 0.0
    %437 = vmatprep.subr.mxu0 0.0
    %438 = vmatpush1.msra.mxu0 0.0
    %439 = vmatprep.subr.mxu0 0.0
    %440 = vmatpush1.msra.mxu0 0.0
    %441 = vmatprep.subr.mxu0 0.0
    %442 = vmatpush1.msra.mxu0 0.0
    %443 = vmatprep.subr.mxu0 0.0
    %444 = vmatpush1.msra.mxu0 0.0
    %445 = vmatprep.subr.mxu0 0.0
    %446 = vmatpush1.msra.mxu0 0.0
    %447 = vmatprep.subr.mxu0 0.0
    %448 = vmatpush1.msra.mxu0 0.0
    %449 = vmatprep.subr.mxu0 0.0
    %450 = vmatpush1.msra.mxu0 0.0
    %451 = vmatprep.subr.mxu0 0.0
    %452 = vmatpush1.msra.mxu0 %v416
    %453 = vmatprep.subr.mxu0 0.0
    %454 = vmatpush1.msra.mxu0 %v415
    %455 = vmatprep.subr.mxu0 0.0
    %456 = vmatpush1.msra.mxu0 %v414
    %457 = vmatprep.subr.mxu0 0.0
    %458 = vmatpush1.msra.mxu0 %v413
    %459 = vmatprep.subr.mxu0 0.0
    %460 = vmatpush2.msra.mxu0 0.0
    %461 = vmatprep.subr.mxu0 0.0
    %462 = vmatpush2.msra.mxu0 0.0
    %463 = vmatprep.subr.mxu0 0.0
    %464 = vmatpush2.msra.mxu0 0.0
    %465 = vmatprep.subr.mxu0 0.0
    %466 = vmatpush2.msra.mxu0 0.0
    %467 = vmatprep.subr.mxu0 0.0
    %468 = vmatpush2.msra.mxu0 0.0
    %469 = vmatprep.subr.mxu0 0.0
    %470 = vmatpush2.msra.mxu0 0.0
    %471 = vmatprep.subr.mxu0 0.0
    %472 = vmatpush2.msra.mxu0 0.0
    %473 = vmatprep.subr.mxu0 0.0
    %474 = vmatpush2.msra.mxu0 0.0
    %475 = vmatprep.subr.mxu0 0.0
    %476 = vmatpush2.msra.mxu0 0.0
    %477 = vmatprep.subr.mxu0 0.0
    %478 = vmatpush2.msra.mxu0 0.0
    %479 = vmatprep.subr.mxu0 0.0
    %480 = vmatpush2.msra.mxu0 0.0
    %481 = vmatprep.subr.mxu0 0.0
    %482 = vmatpush2.msra.mxu0 0.0
    %483 = vmatprep.subr.mxu0 0.0
    %484 = vmatpush2.msra.mxu0 0.0
    %485 = vmatprep.subr.mxu0 0.0
    %486 = vmatpush2.msra.mxu0 0.0
    %487 = vmatprep.subr.mxu0 0.0
    %488 = vmatpush2.msra.mxu0 0.0
    %489 = vmatprep.subr.mxu0 0.0
    %490 = vmatpush2.msra.mxu0 0.0
    %491 = vmatprep.mubr.f32.mxu0 0.0
    %492 = vmatmul.mubr.f32.gmra.mxu0 %v425
    %v493 = vpop.f32.mrf.mxu0
    %v494 = vadd.f32 %v422, %v493
    %v495 = vpop.f32.mrf.mxu0
    %496 = vdwg.mxu0
    %v497 = vsub.f32 %v494, %v44
    %s498 = sld [smem:[#allocation2]]
    %v499 = vmul.f32 %v497, %v497
    %vm500 = vcmask 59392
    %v501 = vsel %vm500, %v499, 0.0
    %502 = vadd.xlane.f32.xlu0 %v501
    %v503 = vpop.xlane.xlu0 %502
    %v504 = vrot.slane %v503, 4
    %v505 = vadd.f32 %v503, %v504
    %v506 = vrot.slane %v505, 2
    %v507 = vadd.f32 %v505, %v506
    %v508 = vrot.slane %v507, 1
    %v509 = vadd.f32 %v507, %v508
    %s510 = vtos %v509
    %s511 = sadd.f32 %s498, %s510
    %s512 = scalar_lea.smem [#allocation2], 0
    %513 = sst [smem:[%s512]] %s511
    // Predicated region
    $region46: #{single_step_loss.1} parent=1 // pred_check
      %p514 = pneg %p36
    $region47: #{single_step_loss.1} parent=1 // pred_check_branch
      %516 = sbr.rel (%p514) target = $region49
    $region48: #{single_step_loss.1} parent=1 // pred_region
      %s517 = sld [smem:[#allocation2]]
      %s518 = smul.f32 %s517, 0.041666668
      %s519 = scalar_lea.smem [#allocation3], 0
      %520 = sst [smem:[%s519]] %s518
    $region49: #{single_step_loss.1} parent=1 // pred_fallthru
      _
    // Predicated region
    $region50: #{single_step_loss.1} parent=1 // pred_check
      _
    $region51: #{single_step_loss.1} parent=1 // pred_check_branch
      %522 = sbr.rel (0) target = $region53
    $region52: #{single_step_loss.1} parent=1 // pred_region
      %s524 = ssub.s32 16, 16
      %525 = vsyncadd [#allocation4], %s524
      %528 = dma.smem_to_hbm [#allocation3], 16, %s10, [#allocation4]
    $region53: #{single_step_loss.1} parent=1 // pred_fallthru
      _
    // Predicated region
    $region54: #{single_step_loss.1} parent=1 // pred_check
      _
    $region55: #{single_step_loss.1} parent=1 // pred_check_branch
      %530 = sbr.rel (0) target = $region57
    $region56: #{single_step_loss.1} parent=1 // pred_region
      %531 = dma.done [#allocation4], 16
    $region57: #{single_step_loss.1} parent=1 // pred_fallthru
      _
    %532 = sfence
    %533 = vsyncpa [#allocation4], 1

</llo_original>
